<compile_context>
chip_gen: v7x
topology: tpu7x:2x2x1
jax: 0.10.0
libtpu: 0.0.40
codegen_flags: <defaults>
</compile_context>

<pallas_src>
import functools

import jax
import jax.numpy as jnp
from jax.experimental import pallas as pl
from jax.experimental.pallas import tpu as pltpu


# ----------------------------- Pallas kernel --------------------------------


def _gcn_fused_kernel(a_ref, x_ref, w1_ref, b1_ref, w2_ref, b2_ref,
                      w3_ref, b3_ref, o_ref):
    bf16 = jnp.bfloat16
    f32 = jnp.float32

    a = a_ref[0]      # (N, N)   bf16  row-normalized adjacency (this graph)
    x0 = x_ref[0]     # (N, Fin) bf16  node features (this graph)

    # ---- layer 1: GraphConv(in, hidden) + ReLU ------------------------------
    # reassociated aggregation: t0 = A_norm @ x0 (narrow contraction), then
    # separate neighbor / root weight matmuls (no lane-axis concat).
    t0 = jnp.dot(a, x0, preferred_element_type=f32)
    h1 = (jnp.dot(t0.astype(bf16), w1_ref[0], preferred_element_type=f32)
          + jnp.dot(x0, w1_ref[1], preferred_element_type=f32)
          + b1_ref[...])
    x1 = jnp.maximum(h1, 0.0)          # f32 ReLU
    x1b = x1.astype(bf16)
    # F.dropout(p=0.4) -> identity in eval mode.

    # ---- layer 2: GraphConv(hidden, hidden) + ReLU ---------------------------
    t1 = jnp.dot(a, x1b, preferred_element_type=f32)
    h2 = (jnp.dot(t1.astype(bf16), w2_ref[0], preferred_element_type=f32)
          + jnp.dot(x1b, w2_ref[1], preferred_element_type=f32)
          + b2_ref[...])
    x2 = jnp.maximum(h2, 0.0)

    # ---- head: Linear(hidden, out_pad) + log_softmax -------------------------
    # padded columns carry a -1e30 bias, so exp() underflows to exactly 0 and
    # the log-softmax over the 128-wide lane-dense slab is exact on real cols.
    logits = jnp.dot(x2.astype(bf16), w3_ref[...],
                     preferred_element_type=f32) + b3_ref[...]
    m = jnp.max(logits, axis=-1, keepdims=True)
    z = logits - m
    lse = jnp.log(jnp.sum(jnp.exp(z), axis=-1, keepdims=True))
    o_ref[0] = (z - lse).astype(o_ref.dtype)


# ------------------------------ Wrappers -------------------------------------


def build_norm_adj(edge_index, num_nodes):
    """Dense row-normalized adjacency with self-loops (mean aggregation).

    Built once per (static) graph and cached by the caller — NOT part of the
    per-forward-call path.
    """
    src = edge_index[0]
    dst = edge_index[1]
    a = jnp.zeros((num_nodes, num_nodes), jnp.float32)
    a = a.at[dst, src].add(1.0)                     # message flows src -> dst
    a = a + jnp.eye(num_nodes, dtype=jnp.float32)   # add_self_loops
    deg = jnp.maximum(jnp.sum(a, axis=1, keepdims=True), 1.0)
    return a / deg


def pack_params(params):
    """One-time packing: bf16 MXU weights, f32 biases, lane-dense padded head."""
    bf16 = jnp.bfloat16
    c_out = params["lw3"].shape[1]
    c_pad = pl.cdiv(c_out, 128) * 128
    return {
        # (2, in, hidden): [0] = neighbor weight, [1] = root (Linear) weight
        "w1": jnp.stack([params["w1"], params["lw1"]]).astype(bf16),
        "b1": params["lb1"],                                   # f32
        "w2": jnp.stack([params["w2"], params["lw2"]]).astype(bf16),
        "b2": params["lb2"],                                   # f32
        # head padded to a 128-wide slab; padded logits pinned to -1e30
        "w3": jnp.pad(params["lw3"], ((0, 0), (0, c_pad - c_out))).astype(bf16),
        "b3": jnp.pad(params["lb3"], ((0, 0), (0, c_pad - c_out)),
                      constant_values=-1e30),                   # f32
    }


@functools.partial(jax.jit, static_argnames=("num_classes",))
def gcn_forward(packed, a_norm, x0, *, num_classes):
    """Batched fused forward.

    a_norm: (B, N, N) bf16   per-graph normalized adjacency (prebuilt/cached)
    x0:     (B, N, F) bf16   node features
    returns (B, N, num_classes) f32 log-probabilities.
    """
    b, n, fin = x0.shape
    c_pad = packed["w3"].shape[1]

    out_pad = pl.pallas_call(
        _gcn_fused_kernel,
        out_shape=jax.ShapeDtypeStruct((b, n, c_pad), jnp.float32),
        grid=(b,),
        in_specs=[
            pl.BlockSpec((1, n, n), lambda g: (g, 0, 0)),            # A (per graph)
            pl.BlockSpec((1, n, fin), lambda g: (g, 0, 0)),          # x (per graph)
            pl.BlockSpec(packed["w1"].shape, lambda g: (0, 0, 0)),   # shared weights:
            pl.BlockSpec(packed["b1"].shape, lambda g: (0, 0)),      #  constant index
            pl.BlockSpec(packed["w2"].shape, lambda g: (0, 0, 0)),   #  -> DMA'd once,
            pl.BlockSpec(packed["b2"].shape, lambda g: (0, 0)),      #  reused across
            pl.BlockSpec(packed["w3"].shape, lambda g: (0, 0)),      #  grid steps
            pl.BlockSpec(packed["b3"].shape, lambda g: (0, 0)),
        ],
        out_specs=pl.BlockSpec((1, n, c_pad), lambda g: (g, 0, 0)),
        compiler_params=pltpu.CompilerParams(
            dimension_semantics=("parallel",)),
    )(a_norm, x0, packed["w1"], packed["b1"], packed["w2"], packed["b2"],
      packed["w3"], packed["b3"])

    return out_pad[..., :num_classes]


# ------------------------------ Param init -----------------------------------


def init_params(key, in_channel, hidden, out_channel):
    ks = jax.random.split(key, 8)

    def u(k, shape, fan_in):
        bound = 1.0 / jnp.sqrt(jnp.float32(fan_in))
        return jax.random.uniform(k, shape, jnp.float32, -bound, bound)

    return {
        # conv1: GraphConv(in_channel, hidden)
        "w1": u(ks[0], (in_channel, hidden), in_channel),
        "lw1": u(ks[1], (in_channel, hidden), in_channel),
        "lb1": u(ks[2], (1, hidden), in_channel),
        # conv2: GraphConv(hidden, hidden)
        "w2": u(ks[3], (hidden, hidden), hidden),
        "lw2": u(ks[4], (hidden, hidden), hidden),
        "lb2": u(ks[5], (1, hidden), hidden),
        # lin: Linear(hidden, out_channel)
        "lw3": u(ks[6], (hidden, out_channel), hidden),
        "lb3": u(ks[7], (1, out_channel), hidden),
    }


# ----------------------- Pure-JAX references (checking) -----------------------


def gcn_reference_f32(params, x0, a_norm):
    """Full f32 reference (batched). x0: (B,N,F) f32, a_norm: (B,N,N) f32."""
    def conv(x, w, lw, lb):
        agg = jnp.einsum("bij,bjh->bih", a_norm, x @ w)
        return jnp.maximum(agg + x @ lw + lb, 0.0)

    x1 = conv(x0, params["w1"], params["lw1"], params["lb1"])
    x2 = conv(x1, params["w2"], params["lw2"], params["lb2"])
    logits = x2 @ params["lw3"] + params["lb3"]
    return jax.nn.log_softmax(logits, axis=-1)


def gcn_reference_bf16(params, x0, a_norm):
    """Mirrors the kernel's mixed precision (bf16 MXU operands, f32 acc)."""
    bf16 = jnp.bfloat16
    f32 = jnp.float32

    def wdot(lhs, rhs):
        return jnp.einsum("bnf,fh->bnh", lhs.astype(bf16), rhs.astype(bf16),
                          preferred_element_type=f32)

    def agg(x):
        return jnp.einsum("bij,bjf->bif", a_norm.astype(bf16), x.astype(bf16),
                          preferred_element_type=f32)

    def conv(x, w, lw, lb):
        return jnp.maximum(wdot(agg(x), w) + wdot(x, lw) + lb, 0.0)

    x1 = conv(x0.astype(bf16), params["w1"], params["lw1"], params["lb1"])
    x2 = conv(x1, params["w2"], params["lw2"], params["lb2"])
    logits = wdot(x2, params["lw3"]) + params["lb3"]
    return jax.nn.log_softmax(logits, axis=-1)


# --------------------------------- Main ---------------------------------------


if __name__ == "__main__":
    key = jax.random.PRNGKey(0)
    k_x, k_e, k_p = jax.random.split(key, 3)

    num_graphs = 8
    num_nodes = 16
    num_edges = 40
    in_channel = 8
    hidden_channels = 32
    out_channel = 4

    x0 = jax.random.normal(k_x, (num_graphs, num_nodes, in_channel), jnp.float32)
    edge_index = jax.random.randint(k_e, (num_graphs, 2, num_edges), 0, num_nodes,
                                    dtype=jnp.int32)
    params = init_params(k_p, in_channel, hidden_channels, out_channel)

    # One-time prep, hoisted out of the per-call path (static graphs / model).
    a_norm_f32 = jax.vmap(lambda e: build_norm_adj(e, num_nodes))(edge_index)
    a_norm = a_norm_f32.astype(jnp.bfloat16)
    x0_b = x0.astype(jnp.bfloat16)
    packed = pack_params(params)

    out = jax.block_until_ready(
        gcn_forward(packed, a_norm, x0_b, num_classes=out_channel))

    assert out.shape == (num_graphs, num_nodes, out_channel)
    # log_softmax rows should sum (in prob space) to ~1
    assert bool(jnp.all(jnp.abs(jnp.sum(jnp.exp(out), axis=-1) - 1.0) < 1e-3))
    # kernel vs precision-matched reference (tight)
    ref_mixed = gcn_reference_bf16(params, x0, a_norm_f32)
    assert bool(jnp.allclose(out, ref_mixed, atol=2e-3, rtol=2e-3))
    # kernel vs full-f32 reference (loose, absorbs bf16 operand rounding)
    ref_f32 = gcn_reference_f32(params, x0, a_norm_f32)
    assert bool(jnp.allclose(out, ref_f32, atol=6e-2, rtol=6e-2))
    print("KERNEL_OK")
</pallas_src>

<mosaic_0001>
module attributes {stable_mosaic.version = 11 : i64} {
  func.func @_gcn_fused_kernel(%arg0: i32, %arg1: memref<1x16x16xbf16, #tpu.memory_space<vmem>>, %arg2: memref<1x16x8xbf16, #tpu.memory_space<vmem>>, %arg3: memref<2x8x32xbf16, #tpu.memory_space<vmem>>, %arg4: memref<1x32xf32, #tpu.memory_space<vmem>>, %arg5: memref<2x32x32xbf16, #tpu.memory_space<vmem>>, %arg6: memref<1x32xf32, #tpu.memory_space<vmem>>, %arg7: memref<32x128xbf16, #tpu.memory_space<vmem>>, %arg8: memref<1x128xf32, #tpu.memory_space<vmem>>, %arg9: memref<1x16x128xf32, #tpu.memory_space<vmem>>) attributes {dimension_semantics = [#tpu.dimension_semantics<parallel>], iteration_bounds = array<i64: 8>, scalar_prefetch = 0 : i64, scratch_operands = 0 : i64, tpu.core_type = #tpu.core_type<tc>, window_params = [{transform_indices = @transform_0, window_bounds = array<i64: 1, 16, 16>}, {transform_indices = @transform_1, window_bounds = array<i64: 1, 16, 8>}, {pipeline_mode = #tpu.pipeline_mode<synchronous>, transform_indices = @transform_2, window_bounds = array<i64: 2, 8, 32>}, {pipeline_mode = #tpu.pipeline_mode<synchronous>, transform_indices = @transform_3, window_bounds = array<i64: 1, 32>}, {pipeline_mode = #tpu.pipeline_mode<synchronous>, transform_indices = @transform_4, window_bounds = array<i64: 2, 32, 32>}, {pipeline_mode = #tpu.pipeline_mode<synchronous>, transform_indices = @transform_5, window_bounds = array<i64: 1, 32>}, {pipeline_mode = #tpu.pipeline_mode<synchronous>, transform_indices = @transform_6, window_bounds = array<i64: 32, 128>}, {pipeline_mode = #tpu.pipeline_mode<synchronous>, transform_indices = @transform_7, window_bounds = array<i64: 1, 128>}, {transform_indices = @transform_8, window_bounds = array<i64: 1, 16, 128>}]} {
    %c0 = arith.constant 0 : index
    %c0_0 = arith.constant 0 : index
    %c0_1 = arith.constant 0 : index
    %0 = vector.load %arg1[%c0, %c0_0, %c0_1] : memref<1x16x16xbf16, #tpu.memory_space<vmem>>, vector<1x16x16xbf16>
    %1 = vector.shape_cast %0 : vector<1x16x16xbf16> to vector<16x16xbf16>
    %c0_2 = arith.constant 0 : index
    %c0_3 = arith.constant 0 : index
    %c0_4 = arith.constant 0 : index
    %2 = vector.load %arg2[%c0_2, %c0_3, %c0_4] : memref<1x16x8xbf16, #tpu.memory_space<vmem>>, vector<1x16x8xbf16>
    %3 = vector.shape_cast %2 : vector<1x16x8xbf16> to vector<16x8xbf16>
    %cst = arith.constant dense<0.000000e+00> : vector<16x8xf32>
    %4 = tpu.matmul %1, %3, %cst {dimension_numbers = #tpu.dot_dimension_numbers<[1], [0], [0], [1], [0, 0, 1, 1], [], []>} : vector<16x16xbf16>, vector<16x8xbf16>, vector<16x8xf32> -> vector<16x8xf32>
    %5 = arith.truncf %4 : vector<16x8xf32> to vector<16x8xbf16>
    %c0_5 = arith.constant 0 : index
    %c0_6 = arith.constant 0 : index
    %c0_7 = arith.constant 0 : index
    %6 = vector.load %arg3[%c0_5, %c0_6, %c0_7] : memref<2x8x32xbf16, #tpu.memory_space<vmem>>, vector<1x8x32xbf16>
    %7 = vector.shape_cast %6 : vector<1x8x32xbf16> to vector<8x32xbf16>
    %cst_8 = arith.constant dense<0.000000e+00> : vector<16x32xf32>
    %8 = tpu.matmul %5, %7, %cst_8 {dimension_numbers = #tpu.dot_dimension_numbers<[1], [0], [0], [1], [0, 0, 1, 1], [], []>} : vector<16x8xbf16>, vector<8x32xbf16>, vector<16x32xf32> -> vector<16x32xf32>
    %c1 = arith.constant 1 : index
    %c0_9 = arith.constant 0 : index
    %c0_10 = arith.constant 0 : index
    %9 = vector.load %arg3[%c1, %c0_9, %c0_10] : memref<2x8x32xbf16, #tpu.memory_space<vmem>>, vector<1x8x32xbf16>
    %10 = vector.shape_cast %9 : vector<1x8x32xbf16> to vector<8x32xbf16>
    %cst_11 = arith.constant dense<0.000000e+00> : vector<16x32xf32>
    %11 = tpu.matmul %3, %10, %cst_11 {dimension_numbers = #tpu.dot_dimension_numbers<[1], [0], [0], [1], [0, 0, 1, 1], [], []>} : vector<16x8xbf16>, vector<8x32xbf16>, vector<16x32xf32> -> vector<16x32xf32>
    %12 = arith.addf %8, %11 : vector<16x32xf32>
    %c0_12 = arith.constant 0 : index
    %c0_13 = arith.constant 0 : index
    %13 = vector.load %arg4[%c0_12, %c0_13] : memref<1x32xf32, #tpu.memory_space<vmem>>, vector<1x32xf32>
    %14 = vector.broadcast %13 : vector<1x32xf32> to vector<16x32xf32>
    %15 = arith.addf %12, %14 : vector<16x32xf32>
    %cst_14 = arith.constant 0.000000e+00 : f32
    %16 = vector.broadcast %cst_14 : f32 to vector<16x32xf32>
    %17 = arith.maximumf %15, %16 : vector<16x32xf32>
    %18 = arith.truncf %17 : vector<16x32xf32> to vector<16x32xbf16>
    %cst_15 = arith.constant dense<0.000000e+00> : vector<16x32xf32>
    %19 = tpu.matmul %1, %18, %cst_15 {dimension_numbers = #tpu.dot_dimension_numbers<[1], [0], [0], [1], [0, 0, 1, 1], [], []>} : vector<16x16xbf16>, vector<16x32xbf16>, vector<16x32xf32> -> vector<16x32xf32>
    %20 = arith.truncf %19 : vector<16x32xf32> to vector<16x32xbf16>
    %c0_16 = arith.constant 0 : index
    %c0_17 = arith.constant 0 : index
    %c0_18 = arith.constant 0 : index
    %21 = vector.load %arg5[%c0_16, %c0_17, %c0_18] : memref<2x32x32xbf16, #tpu.memory_space<vmem>>, vector<1x32x32xbf16>
    %22 = vector.shape_cast %21 : vector<1x32x32xbf16> to vector<32x32xbf16>
    %cst_19 = arith.constant dense<0.000000e+00> : vector<16x32xf32>
    %23 = tpu.matmul %20, %22, %cst_19 {dimension_numbers = #tpu.dot_dimension_numbers<[1], [0], [0], [1], [0, 0, 1, 1], [], []>} : vector<16x32xbf16>, vector<32x32xbf16>, vector<16x32xf32> -> vector<16x32xf32>
    %c1_20 = arith.constant 1 : index
    %c0_21 = arith.constant 0 : index
    %c0_22 = arith.constant 0 : index
    %24 = vector.load %arg5[%c1_20, %c0_21, %c0_22] : memref<2x32x32xbf16, #tpu.memory_space<vmem>>, vector<1x32x32xbf16>
    %25 = vector.shape_cast %24 : vector<1x32x32xbf16> to vector<32x32xbf16>
    %cst_23 = arith.constant dense<0.000000e+00> : vector<16x32xf32>
    %26 = tpu.matmul %18, %25, %cst_23 {dimension_numbers = #tpu.dot_dimension_numbers<[1], [0], [0], [1], [0, 0, 1, 1], [], []>} : vector<16x32xbf16>, vector<32x32xbf16>, vector<16x32xf32> -> vector<16x32xf32>
    %27 = arith.addf %23, %26 : vector<16x32xf32>
    %c0_24 = arith.constant 0 : index
    %c0_25 = arith.constant 0 : index
    %28 = vector.load %arg6[%c0_24, %c0_25] : memref<1x32xf32, #tpu.memory_space<vmem>>, vector<1x32xf32>
    %29 = vector.broadcast %28 : vector<1x32xf32> to vector<16x32xf32>
    %30 = arith.addf %27, %29 : vector<16x32xf32>
    %cst_26 = arith.constant 0.000000e+00 : f32
    %31 = vector.broadcast %cst_26 : f32 to vector<16x32xf32>
    %32 = arith.maximumf %30, %31 : vector<16x32xf32>
    %33 = arith.truncf %32 : vector<16x32xf32> to vector<16x32xbf16>
    %c0_27 = arith.constant 0 : index
    %c0_28 = arith.constant 0 : index
    %34 = vector.load %arg7[%c0_27, %c0_28] : memref<32x128xbf16, #tpu.memory_space<vmem>>, vector<32x128xbf16>
    %cst_29 = arith.constant dense<0.000000e+00> : vector<16x128xf32>
    %35 = tpu.matmul %33, %34, %cst_29 {dimension_numbers = #tpu.dot_dimension_numbers<[1], [0], [0], [1], [0, 0, 1, 1], [], []>} : vector<16x32xbf16>, vector<32x128xbf16>, vector<16x128xf32> -> vector<16x128xf32>
    %c0_30 = arith.constant 0 : index
    %c0_31 = arith.constant 0 : index
    %36 = vector.load %arg8[%c0_30, %c0_31] : memref<1x128xf32, #tpu.memory_space<vmem>>, vector<1x128xf32>
    %37 = vector.broadcast %36 : vector<1x128xf32> to vector<16x128xf32>
    %38 = arith.addf %35, %37 : vector<16x128xf32>
    %cst_32 = arith.constant dense<0xFF800000> : vector<16xf32>
    %39 = vector.multi_reduction <maximumf>, %38, %cst_32 [1] : vector<16x128xf32> to vector<16xf32>
    %40 = vector.shape_cast %39 : vector<16xf32> to vector<16x1xf32>
    %41 = vector.broadcast %40 : vector<16x1xf32> to vector<16x128xf32>
    %42 = arith.subf %38, %41 : vector<16x128xf32>
    %43 = math.exp %42 : vector<16x128xf32>
    %cst_33 = arith.constant dense<0.000000e+00> : vector<16xf32>
    %44 = vector.multi_reduction <add>, %43, %cst_33 [1] : vector<16x128xf32> to vector<16xf32>
    %45 = vector.shape_cast %44 : vector<16xf32> to vector<16x1xf32>
    %46 = math.log %45 : vector<16x1xf32>
    %47 = vector.broadcast %46 : vector<16x1xf32> to vector<16x128xf32>
    %48 = arith.subf %42, %47 : vector<16x128xf32>
    %c0_34 = arith.constant 0 : index
    %c0_35 = arith.constant 0 : index
    %c0_36 = arith.constant 0 : index
    %49 = vector.load %arg9[%c0_34, %c0_35, %c0_36] : memref<1x16x128xf32, #tpu.memory_space<vmem>>, vector<1x16x128xf32>
    %50 = vector.shape_cast %49 : vector<1x16x128xf32> to vector<16x128xf32>
    %51 = vector.shape_cast %48 : vector<16x128xf32> to vector<1x16x128xf32>
    tpu.vector_store %arg9[%c0_34, %c0_35, %c0_36], %51 {strides = array<i32>} : memref<1x16x128xf32, #tpu.memory_space<vmem>>, vector<1x16x128xf32>,
    return
  }
  func.func @transform_0(%arg0: i32) -> (i32, i32, i32) {
    %c0_i32 = arith.constant 0 : i32
    %c0_i32_0 = arith.constant 0 : i32
    %c0_i32_1 = arith.constant 0 : i32
    return %arg0, %c0_i32, %c0_i32_0 : i32, i32, i32
  }
  func.func @transform_1(%arg0: i32) -> (i32, i32, i32) {
    %c0_i32 = arith.constant 0 : i32
    %c0_i32_0 = arith.constant 0 : i32
    %c0_i32_1 = arith.constant 0 : i32
    return %arg0, %c0_i32, %c0_i32_0 : i32, i32, i32
  }
  func.func @transform_2(%arg0: i32) -> (i32, i32, i32) {
    %c0_i32 = arith.constant 0 : i32
    %c0_i32_0 = arith.constant 0 : i32
    %c0_i32_1 = arith.constant 0 : i32
    %c0_i32_2 = arith.constant 0 : i32
    return %c0_i32, %c0_i32_0, %c0_i32_1 : i32, i32, i32
  }
  func.func @transform_3(%arg0: i32) -> (i32, i32) {
    %c0_i32 = arith.constant 0 : i32
    %c0_i32_0 = arith.constant 0 : i32
    %c0_i32_1 = arith.constant 0 : i32
    return %c0_i32, %c0_i32_0 : i32, i32
  }
  func.func @transform_4(%arg0: i32) -> (i32, i32, i32) {
    %c0_i32 = arith.constant 0 : i32
    %c0_i32_0 = arith.constant 0 : i32
    %c0_i32_1 = arith.constant 0 : i32
    %c0_i32_2 = arith.constant 0 : i32
    return %c0_i32, %c0_i32_0, %c0_i32_1 : i32, i32, i32
  }
  func.func @transform_5(%arg0: i32) -> (i32, i32) {
    %c0_i32 = arith.constant 0 : i32
    %c0_i32_0 = arith.constant 0 : i32
    %c0_i32_1 = arith.constant 0 : i32
    return %c0_i32, %c0_i32_0 : i32, i32
  }
  func.func @transform_6(%arg0: i32) -> (i32, i32) {
    %c0_i32 = arith.constant 0 : i32
    %c0_i32_0 = arith.constant 0 : i32
    %c0_i32_1 = arith.constant 0 : i32
    return %c0_i32, %c0_i32_0 : i32, i32
  }
  func.func @transform_7(%arg0: i32) -> (i32, i32) {
    %c0_i32 = arith.constant 0 : i32
    %c0_i32_0 = arith.constant 0 : i32
    %c0_i32_1 = arith.constant 0 : i32
    return %c0_i32, %c0_i32_0 : i32, i32
  }
  func.func @transform_8(%arg0: i32) -> (i32, i32, i32) {
    %c0_i32 = arith.constant 0 : i32
    %c0_i32_0 = arith.constant 0 : i32
    %c0_i32_1 = arith.constant 0 : i32
    return %arg0, %c0_i32, %c0_i32_0 : i32, i32, i32
  }
}

</mosaic_0001>

<llo_original>
// kernel: gcn_forward.1
$region0: #{gcn_forward.1}
  #allocation0 [shape = 'u32[]', space=smem, size = 0x4, offset = 0x4, fixed_abs, tag = 'smem constant byte address 0x4 - core index']
  #allocation1 [shape = 'u32[144,128]{1,0:T(1,128)}', space=vmem, size = 0x12000, scoped, tag = 'internal scratch']
  %s0 = inlined_call_operand.vmem [shape: bf16[8,16,16], index: 0, kind: input, shape index: {}]
  %s1 = inlined_call_operand.vmem [shape: bf16[8,16,8], index: 1, kind: input, shape index: {}]
  %s2 = inlined_call_operand.hbm [shape: bf16[2,8,32], index: 2, kind: input, shape index: {}]
  %s3 = inlined_call_operand.vmem [shape: f32[1,32], index: 3, kind: input, shape index: {}]
  %s4 = inlined_call_operand.vmem [shape: bf16[2,32,32], index: 4, kind: input, shape index: {}]
  %s5 = inlined_call_operand.vmem [shape: f32[1,32], index: 5, kind: input, shape index: {}]
  %s6 = inlined_call_operand.vmem [shape: bf16[32,128], index: 6, kind: input, shape index: {}]
  %s7 = inlined_call_operand.vmem [shape: f32[1,128], index: 7, kind: input, shape index: {}]
  %s8 = inlined_call_operand.vmem [shape: f32[8,16,128], index: 8, kind: output, shape index: {}]
  %s9 = sld [smem:[#allocation0]]
  $region69: #{gcn_forward.1} parent=0
    _
  %s11 = ssub.s32 1, %s9
  %s12 = scalar_select 0, %s11, %s9
  $region1: #{gcn_forward.1} parent=0
    #allocation2 [shape = 'u8[4096]{0}', space=vmem, size = 0x1000, scoped, tag = 'input window, operand 2, single buffered']
    #allocation3 [shape = 's32[2]{0}', space=sflag, size = 0x8, scoped, tag = 'scoped memory for gcn_forward.1']
    %13 = vsyncpa [#allocation3], 0
    loop: start=0, step=1, limit=10
    $region2: #{gcn_forward.1} parent=1 // loop_pre_header
      _
    $region3: #{gcn_forward.1} parent=1 // loop_header
      %s15 = sphi 0, %s19
      %p16 = scmp.ge.s32.totalorder %s15, 10
      %s25 = sphi 0, %s27
      %s28 = sphi 0, %s25
      %s29 = sphi 0, %s28
      %s45 = sphi 0, %s29
      %s51 = sphi 0, %s53
      %s54 = sphi 0, %s51
      %s55 = sphi 0, %s54
      %s71 = sphi 0, %s55
      %s75 = sphi 0, %s75
      %s77 = sphi 0, %s75
      %s78 = sphi 0, %s77
      %s92 = sphi 0, %s78
      %s96 = sphi 0, %s96
      %s98 = sphi 0, %s96
      %s99 = sphi 0, %s98
      %s113 = sphi 0, %s99
      %s117 = sphi 0, %s117
      %s119 = sphi 0, %s117
      %s120 = sphi 0, %s119
      %s134 = sphi 0, %s120
      %s138 = sphi 0, %s138
      %s140 = sphi 0, %s138
      %s141 = sphi 0, %s140
      %s155 = sphi 0, %s141
      %s159 = sphi 0, %s159
      %s161 = sphi 0, %s159
      %s162 = sphi 0, %s161
      %s176 = sphi 0, %s162
      %s180 = sphi 0, %s180
      %s182 = sphi 0, %s180
      %s183 = sphi 0, %s182
      %s197 = sphi 0, %s183
      %s203 = sphi 0, %s205
      %s206 = sphi 0, %s203
      %s207 = sphi 0, %s206
      %s223 = sphi 0, %s207
    $region4: #{gcn_forward.1} parent=1 // loop_header_branch
      %18 = sbr.rel (%p16) target = $region8
    $region5: #{gcn_forward.1} parent=1 // loop_body
      %s20 = ssub.s32 %s15, 1
      %s21 = ssub.s32 %s15, 2
      %s22 = sadd.s32 %s15, 1
      %s23 = ssub.s32 %s15, %s22
      %p24 = scmp.eq.s32.totalorder %s23, 0
      %s26 = sadd.s32 %s25, 1
      %s27 = scalar_select %p24, %s25, %s26
      %p30 = pneg %p24
      %p31 = scmp.eq.s32.totalorder %s15, 7
      %p32 = por %p30, %p31
      %p33 = scmp.ne.s32.totalorder %s25, %s28
      %p34 = scmp.eq.s32.totalorder %s15, 0
      %p35 = por %p33, %p34
      %p36 = scmp.ne.s32.totalorder %s25, %s28
      %p37 = scmp.eq.s32.totalorder %s20, 7
      %p38 = por %p36, %p37
      %p39 = scmp.ne.s32.totalorder %s28, %s29
      %p40 = scmp.eq.s32.totalorder %s20, 0
      %p41 = por %p39, %p40
      %p42 = scmp.ne.s32.totalorder %s28, %s29
      %p43 = scmp.eq.s32.totalorder %s21, 7
      %p44 = por %p42, %p43
      %p46 = scmp.ne.s32.totalorder %s29, %s45
      %p47 = scmp.eq.s32.totalorder %s21, 0
      %p48 = por %p46, %p47
      %s49 = ssub.s32 %s15, %s22
      %p50 = scmp.eq.s32.totalorder %s49, 0
      %s52 = sadd.s32 %s51, 1
      %s53 = scalar_select %p50, %s51, %s52
      %p56 = pneg %p50
      %p57 = scmp.eq.s32.totalorder %s15, 7
      %p58 = por %p56, %p57
      %p59 = scmp.ne.s32.totalorder %s51, %s54
      %p60 = scmp.eq.s32.totalorder %s15, 0
      %p61 = por %p59, %p60
      %p62 = scmp.ne.s32.totalorder %s51, %s54
      %p63 = scmp.eq.s32.totalorder %s20, 7
      %p64 = por %p62, %p63
      %p65 = scmp.ne.s32.totalorder %s54, %s55
      %p66 = scmp.eq.s32.totalorder %s20, 0
      %p67 = por %p65, %p66
      %p68 = scmp.ne.s32.totalorder %s54, %s55
      %p69 = scmp.eq.s32.totalorder %s21, 7
      %p70 = por %p68, %p69
      %p72 = scmp.ne.s32.totalorder %s55, %s71
      %p73 = scmp.eq.s32.totalorder %s21, 0
      %p74 = por %p72, %p73
      %s76 = sadd.s32 %s75, 1
      %p79 = scmp.eq.s32.totalorder %s15, 7
      %p80 = scmp.ne.s32.totalorder %s75, %s77
      %p81 = scmp.eq.s32.totalorder %s15, 0
      %p82 = por %p80, %p81
      %p83 = scmp.ne.s32.totalorder %s75, %s77
      %p84 = scmp.eq.s32.totalorder %s20, 7
      %p85 = por %p83, %p84
      %p86 = scmp.ne.s32.totalorder %s77, %s78
      %p87 = scmp.eq.s32.totalorder %s20, 0
      %p88 = por %p86, %p87
      %p89 = scmp.ne.s32.totalorder %s77, %s78
      %p90 = scmp.eq.s32.totalorder %s21, 7
      %p91 = por %p89, %p90
      %p93 = scmp.ne.s32.totalorder %s78, %s92
      %p94 = scmp.eq.s32.totalorder %s21, 0
      %p95 = por %p93, %p94
      %s97 = sadd.s32 %s96, 1
      %p100 = scmp.eq.s32.totalorder %s15, 7
      %p101 = scmp.ne.s32.totalorder %s96, %s98
      %p102 = scmp.eq.s32.totalorder %s15, 0
      %p103 = por %p101, %p102
      %p104 = scmp.ne.s32.totalorder %s96, %s98
      %p105 = scmp.eq.s32.totalorder %s20, 7
      %p106 = por %p104, %p105
      %p107 = scmp.ne.s32.totalorder %s98, %s99
      %p108 = scmp.eq.s32.totalorder %s20, 0
      %p109 = por %p107, %p108
      %p110 = scmp.ne.s32.totalorder %s98, %s99
      %p111 = scmp.eq.s32.totalorder %s21, 7
      %p112 = por %p110, %p111
      %p114 = scmp.ne.s32.totalorder %s99, %s113
      %p115 = scmp.eq.s32.totalorder %s21, 0
      %p116 = por %p114, %p115
      %s118 = sadd.s32 %s117, 1
      %p121 = scmp.eq.s32.totalorder %s15, 7
      %p122 = scmp.ne.s32.totalorder %s117, %s119
      %p123 = scmp.eq.s32.totalorder %s15, 0
      %p124 = por %p122, %p123
      %p125 = scmp.ne.s32.totalorder %s117, %s119
      %p126 = scmp.eq.s32.totalorder %s20, 7
      %p127 = por %p125, %p126
      %p128 = scmp.ne.s32.totalorder %s119, %s120
      %p129 = scmp.eq.s32.totalorder %s20, 0
      %p130 = por %p128, %p129
      %p131 = scmp.ne.s32.totalorder %s119, %s120
      %p132 = scmp.eq.s32.totalorder %s21, 7
      %p133 = por %p131, %p132
      %p135 = scmp.ne.s32.totalorder %s120, %s134
      %p136 = scmp.eq.s32.totalorder %s21, 0
      %p137 = por %p135, %p136
      %s139 = sadd.s32 %s138, 1
      %p142 = scmp.eq.s32.totalorder %s15, 7
      %p143 = scmp.ne.s32.totalorder %s138, %s140
      %p144 = scmp.eq.s32.totalorder %s15, 0
      %p145 = por %p143, %p144
      %p146 = scmp.ne.s32.totalorder %s138, %s140
      %p147 = scmp.eq.s32.totalorder %s20, 7
      %p148 = por %p146, %p147
      %p149 = scmp.ne.s32.totalorder %s140, %s141
      %p150 = scmp.eq.s32.totalorder %s20, 0
      %p151 = por %p149, %p150
      %p152 = scmp.ne.s32.totalorder %s140, %s141
      %p153 = scmp.eq.s32.totalorder %s21, 7
      %p154 = por %p152, %p153
      %p156 = scmp.ne.s32.totalorder %s141, %s155
      %p157 = scmp.eq.s32.totalorder %s21, 0
      %p158 = por %p156, %p157
      %s160 = sadd.s32 %s159, 1
      %p163 = scmp.eq.s32.totalorder %s15, 7
      %p164 = scmp.ne.s32.totalorder %s159, %s161
      %p165 = scmp.eq.s32.totalorder %s15, 0
      %p166 = por %p164, %p165
      %p167 = scmp.ne.s32.totalorder %s159, %s161
      %p168 = scmp.eq.s32.totalorder %s20, 7
      %p169 = por %p167, %p168
      %p170 = scmp.ne.s32.totalorder %s161, %s162
      %p171 = scmp.eq.s32.totalorder %s20, 0
      %p172 = por %p170, %p171
      %p173 = scmp.ne.s32.totalorder %s161, %s162
      %p174 = scmp.eq.s32.totalorder %s21, 7
      %p175 = por %p173, %p174
      %p177 = scmp.ne.s32.totalorder %s162, %s176
      %p178 = scmp.eq.s32.totalorder %s21, 0
      %p179 = por %p177, %p178
      %s181 = sadd.s32 %s180, 1
      %p184 = scmp.eq.s32.totalorder %s15, 7
      %p185 = scmp.ne.s32.totalorder %s180, %s182
      %p186 = scmp.eq.s32.totalorder %s15, 0
      %p187 = por %p185, %p186
      %p188 = scmp.ne.s32.totalorder %s180, %s182
      %p189 = scmp.eq.s32.totalorder %s20, 7
      %p190 = por %p188, %p189
      %p191 = scmp.ne.s32.totalorder %s182, %s183
      %p192 = scmp.eq.s32.totalorder %s20, 0
      %p193 = por %p191, %p192
      %p194 = scmp.ne.s32.totalorder %s182, %s183
      %p195 = scmp.eq.s32.totalorder %s21, 7
      %p196 = por %p194, %p195
      %p198 = scmp.ne.s32.totalorder %s183, %s197
      %p199 = scmp.eq.s32.totalorder %s21, 0
      %p200 = por %p198, %p199
      %s201 = ssub.s32 %s15, %s22
      %p202 = scmp.eq.s32.totalorder %s201, 0
      %s204 = sadd.s32 %s203, 1
      %s205 = scalar_select %p202, %s203, %s204
      %p208 = pneg %p202
      %p209 = scmp.eq.s32.totalorder %s15, 7
      %p210 = por %p208, %p209
      %p211 = scmp.ne.s32.totalorder %s203, %s206
      %p212 = scmp.eq.s32.totalorder %s15, 0
      %p213 = por %p211, %p212
      %p214 = scmp.ne.s32.totalorder %s203, %s206
      %p215 = scmp.eq.s32.totalorder %s20, 7
      %p216 = por %p214, %p215
      %p217 = scmp.ne.s32.totalorder %s206, %s207
      %p218 = scmp.eq.s32.totalorder %s20, 0
      %p219 = por %p217, %p218
      %p220 = scmp.ne.s32.totalorder %s206, %s207
      %p221 = scmp.eq.s32.totalorder %s21, 7
      %p222 = por %p220, %p221
      %p224 = scmp.ne.s32.totalorder %s207, %s223
      %p225 = scmp.eq.s32.totalorder %s21, 0
      %p226 = por %p224, %p225
      %p227 = scmp.le.s32.totalorder 1, %s15
      %p228 = scmp.lt.s32.totalorder %s15, 9
      %p229 = pnand %p227, %p228
      %p230 = pneg %p229
      // Predicated region
      $region9: #{gcn_forward.1} parent=5 // pred_check
        _
      $region10: #{gcn_forward.1} parent=5 // pred_check_branch
        %232 = sbr.rel (%p229) target = $region12
      $region11: #{gcn_forward.1} parent=5 // pred_region
        %s233 = ssub.s32 %s15, 1
        // Predicated region
        $region13: #{gcn_forward.1} parent=11 // pred_check
          %p234 = pneg %p88
        $region14: #{gcn_forward.1} parent=11 // pred_check_branch
          %236 = sbr.rel (%p234) target = $region16
        $region15: #{gcn_forward.1} parent=11 // pred_region
          %s238 = ssub.s32 128, 128
          %239 = vsyncadd [#allocation3], %s238
          %s240 = sshll.u32 [#allocation2], 4
          %s241 = int_to_ptr.vmem [resolvable:$true] %s240
          %246 = dma.hbm_to_vmem [thread:$0]  %s2, 128, %s241, [#allocation3], 64, 64, 4
        $region16: #{gcn_forward.1} parent=11 // pred_fallthru
          _
        // Predicated region
        $region17: #{gcn_forward.1} parent=11 // pred_check
          %p247 = pneg %p109
        $region18: #{gcn_forward.1} parent=11 // pred_check_branch
          %249 = sbr.rel (%p247) target = $region20
        $region19: #{gcn_forward.1} parent=11 // pred_region
          _
        $region20: #{gcn_forward.1} parent=11 // pred_fallthru
          _
        // Predicated region
        $region21: #{gcn_forward.1} parent=11 // pred_check
          %p250 = pneg %p130
        $region22: #{gcn_forward.1} parent=11 // pred_check_branch
          %252 = sbr.rel (%p250) target = $region24
        $region23: #{gcn_forward.1} parent=11 // pred_region
          _
        $region24: #{gcn_forward.1} parent=11 // pred_fallthru
          _
        // Predicated region
        $region25: #{gcn_forward.1} parent=11 // pred_check
          %p253 = pneg %p151
        $region26: #{gcn_forward.1} parent=11 // pred_check_branch
          %255 = sbr.rel (%p253) target = $region28
        $region27: #{gcn_forward.1} parent=11 // pred_region
          _
        $region28: #{gcn_forward.1} parent=11 // pred_fallthru
          _
        // Predicated region
        $region29: #{gcn_forward.1} parent=11 // pred_check
          %p256 = pneg %p172
        $region30: #{gcn_forward.1} parent=11 // pred_check_branch
          %258 = sbr.rel (%p256) target = $region32
        $region31: #{gcn_forward.1} parent=11 // pred_region
          _
        $region32: #{gcn_forward.1} parent=11 // pred_fallthru
          _
        // Predicated region
        $region33: #{gcn_forward.1} parent=11 // pred_check
          %p259 = pneg %p193
        $region34: #{gcn_forward.1} parent=11 // pred_check_branch
          %261 = sbr.rel (%p259) target = $region36
        $region35: #{gcn_forward.1} parent=11 // pred_region
          _
        $region36: #{gcn_forward.1} parent=11 // pred_fallthru
          _
      $region12: #{gcn_forward.1} parent=5 // pred_fallthru
        _
      %p262 = scmp.lt.s32.totalorder %s15, 8
      // Predicated region
      $region37: #{gcn_forward.1} parent=5 // pred_check
        %p263 = pneg %p262
      $region38: #{gcn_forward.1} parent=5 // pred_check_branch
        %265 = sbr.rel (%p263) target = $region40
      $region39: #{gcn_forward.1} parent=5 // pred_region
        // Predicated region
        $region41: #{gcn_forward.1} parent=39 // pred_check
          %p266 = pneg %p35
        $region42: #{gcn_forward.1} parent=39 // pred_check_branch
          %268 = sbr.rel (%p266) target = $region44
        $region43: #{gcn_forward.1} parent=39 // pred_region
          %p269 = scmp.lt.s32.totalorder %s15, 7
          %s270 = scalar_select %p269, %s15, 7
          %s271 = smul.addr %s270, 2
          %s272 = smul.addr %s271, 4
          %s273 = scalar_lea.vmem %s0, %s272
        $region44: #{gcn_forward.1} parent=39 // pred_fallthru
          _
        // Predicated region
        $region45: #{gcn_forward.1} parent=39 // pred_check
          %p274 = pneg %p61
        $region46: #{gcn_forward.1} parent=39 // pred_check_branch
          %276 = sbr.rel (%p274) target = $region48
        $region47: #{gcn_forward.1} parent=39 // pred_region
          %p277 = scmp.lt.s32.totalorder %s15, 7
          %s278 = scalar_select %p277, %s15, 7
          %s279 = smul.addr %s278, 2
          %s280 = smul.addr %s279, 4
          %s281 = scalar_lea.vmem %s1, %s280
        $region48: #{gcn_forward.1} parent=39 // pred_fallthru
          _
      $region40: #{gcn_forward.1} parent=5 // pred_fallthru
        _
      %p282 = scmp.le.s32.totalorder 1, %s15
      %p283 = scmp.lt.s32.totalorder %s15, 9
      %p284 = pnand %p282, %p283
      %p285 = pneg %p284
      // Predicated region
      $region49: #{gcn_forward.1} parent=5 // pred_check
        _
      $region50: #{gcn_forward.1} parent=5 // pred_check_branch
        %287 = sbr.rel (%p284) target = $region52
      $region51: #{gcn_forward.1} parent=5 // pred_region
        %s288 = ssub.s32 %s15, 1
        // Predicated region
        $region53: #{gcn_forward.1} parent=51 // pred_check
          %p289 = pneg %p88
        $region54: #{gcn_forward.1} parent=51 // pred_check_branch
          %291 = sbr.rel (%p289) target = $region56
        $region55: #{gcn_forward.1} parent=51 // pred_region
          %292 = dma.done [#allocation3], 128
        $region56: #{gcn_forward.1} parent=51 // pred_fallthru
          _
        %p293 = scmp.lt.s32.totalorder %s20, 7
        %s294 = scalar_select %p293, %s20, 7
        %s295 = smul.addr %s294, 2
        %s296 = smul.addr %s295, 4
        %s297 = scalar_lea.vmem %s0, %s296
        %p298 = pneg %p41
        %p299 = pneg %p38
        %p300 = scmp.lt.s32.totalorder %s20, 7
        %s301 = scalar_select %p300, %s20, 7
        %s302 = smul.addr %s301, 2
        %s303 = smul.addr %s302, 4
        %s304 = scalar_lea.vmem %s1, %s303
        %p305 = pneg %p67
        %p306 = pneg %p64
        %p307 = pneg %p88
        %p308 = pneg %p85
        %p309 = pneg %p109
        %p310 = pneg %p106
        %p311 = pneg %p130
        %p312 = pneg %p127
        %p313 = pneg %p151
        %p314 = pneg %p148
        %p315 = pneg %p172
        %p316 = pneg %p169
        %p317 = pneg %p193
        %p318 = pneg %p190
        %p319 = pneg %p219
        %p320 = pneg %p216
        %p321 = scmp.lt.s32.totalorder %s20, 7
        %s322 = scalar_select %p321, %s20, 7
        %s323 = smul.addr %s322, 2
        %s324 = smul.addr %s323, 8
        %s325 = scalar_lea.vmem %s8, %s324
        %p326 = scmp.lt.s32.totalorder %s20, 7
        %s327 = scalar_select %p326, %s20, 7
        %s328 = smul.addr %s327, 2
        %s329 = smul.addr %s328, 4
        %s330 = scalar_lea.vmem %s0, %s329
        %p331 = scmp.lt.s32.totalorder %s20, 7
        %s332 = scalar_select %p331, %s20, 7
        %s333 = smul.addr %s332, 2
        %s334 = smul.addr %s333, 4
        %s335 = scalar_lea.vmem %s1, %s334
        %p336 = scmp.lt.s32.totalorder %s20, 7
        %s337 = scalar_select %p336, %s20, 7
        %s338 = smul.addr %s337, 2
        %s339 = smul.addr %s338, 8
        %s340 = scalar_lea.vmem %s8, %s339
        %v342 = vld [vmem:[%s330] sm:$0xf]
        %v343 = vld [vmem:[%s330 + $0x4] sm:$0xf]
        %v344 = vld [vmem:[%s335] sm:$0xf]
        %v345 = vld [vmem:[%s335 + $0x4] sm:$0xf]
        %v348 = vunpack.c.l.b16 %v342
        %v349 = vunpack.c.l.b16 %v343
        %v350 = vpack.c.b16 %v349, %v348
        %v353 = vunpack.c.l.b16 %v344
        %v354 = vunpack.c.l.b16 %v345
        %v355 = vpack.c.b16 %v354, %v353
        %vm357 = vcmask 130048
        %v359 = vsel %vm357, %v350, 0
        %361 = vmatprep.subr.bf16.mxu0 0
        %362 = vmatpush1.bf16.msra.mxu0 %v355
        %363 = vmatprep.subr.bf16.mxu0 0
        %364 = vmatpush1.bf16.msra.mxu0 0
        %365 = vmatprep.subr.bf16.mxu0 0
        %366 = vmatpush1.bf16.msra.mxu0 0
        %367 = vmatprep.subr.bf16.mxu0 0
        %368 = vmatpush1.bf16.msra.mxu0 0
        %369 = vmatprep.subr.bf16.mxu0 0
        %370 = vmatpush1.bf16.msra.mxu0 0
        %371 = vmatprep.subr.bf16.mxu0 0
        %372 = vmatpush1.bf16.msra.mxu0 0
        %373 = vmatprep.subr.bf16.mxu0 0
        %374 = vmatpush1.bf16.msra.mxu0 0
        %375 = vmatprep.subr.bf16.mxu0 0
        %376 = vmatpush1.bf16.msra.mxu0 0
        %377 = vmatprep.subr.bf16.mxu0 0
        %378 = vmatpush1.bf16.msra.mxu0 0
        %379 = vmatprep.subr.bf16.mxu0 0
        %380 = vmatpush1.bf16.msra.mxu0 0
        %381 = vmatprep.subr.bf16.mxu0 0
        %382 = vmatpush1.bf16.msra.mxu0 0
        %383 = vmatprep.subr.bf16.mxu0 0
        %384 = vmatpush1.bf16.msra.mxu0 0
        %385 = vmatprep.subr.bf16.mxu0 0
        %386 = vmatpush1.bf16.msra.mxu0 0
        %387 = vmatprep.subr.bf16.mxu0 0
        %388 = vmatpush1.bf16.msra.mxu0 0
        %389 = vmatprep.subr.bf16.mxu0 0
        %390 = vmatpush1.bf16.msra.mxu0 0
        %391 = vmatprep.subr.bf16.mxu0 0
        %392 = vmatpush1.bf16.msra.mxu0 0
        %393 = vmatprep.mubr.bf16.mxu0 0
        %394 = vmatmul.mubr.bf16.gmra.mrb[0].mxu0 %v359
        %v395 = vpop.f32.mrb[0].mxu0
        %v396 = vadd.f32 0.0, %v395
        %v397 = vpop.f32.mrb[0].mxu0
        %v398 = vpop.f32.mrb[0].mxu0
        %v399 = vadd.f32 0.0, %v398
        %v400 = vpop.f32.mrb[0].mxu0
        %401 = vdwg.mxu0
        %v402 = vpack.c.bf16 %v399, %v396
        %v403 = vld [vmem:[#allocation2] sm:$0xf]
        %s404 = scalar_lea.vmem [#allocation2], 4
        %v405 = vld [vmem:[%s404] sm:$0xf]
        %vm406 = vcmask 64512
        %v408 = vsel %vm406, %v355, 0
        %vm410 = vcmask 1043456
        %v412 = vsel %vm410, %v405, 0
        %414 = vmatprep.subr.bf16.mxu0 0
        %415 = vmatpush1.bf16.msra.mxu0 %v412
        %416 = vmatprep.subr.bf16.mxu0 0
        %417 = vmatpush1.bf16.msra.mxu0 0
        %418 = vmatprep.subr.bf16.mxu0 0
        %419 = vmatpush1.bf16.msra.mxu0 0
        %420 = vmatprep.subr.bf16.mxu0 0
        %421 = vmatpush1.bf16.msra.mxu0 0
        %422 = vmatprep.subr.bf16.mxu0 0
        %423 = vmatpush1.bf16.msra.mxu0 0
        %424 = vmatprep.subr.bf16.mxu0 0
        %425 = vmatpush1.bf16.msra.mxu0 0
        %426 = vmatprep.subr.bf16.mxu0 0
        %427 = vmatpush1.bf16.msra.mxu0 0
        %428 = vmatprep.subr.bf16.mxu0 0
        %429 = vmatpush1.bf16.msra.mxu0 0
        %430 = vmatprep.subr.bf16.mxu0 0
        %431 = vmatpush1.bf16.msra.mxu0 0
        %432 = vmatprep.subr.bf16.mxu0 0
        %433 = vmatpush1.bf16.msra.mxu0 0
        %434 = vmatprep.subr.bf16.mxu0 0
        %435 = vmatpush1.bf16.msra.mxu0 0
        %436 = vmatprep.subr.bf16.mxu0 0
        %437 = vmatpush1.bf16.msra.mxu0 0
        %438 = vmatprep.subr.bf16.mxu0 0
        %439 = vmatpush1.bf16.msra.mxu0 0
        %440 = vmatprep.subr.bf16.mxu0 0
        %441 = vmatpush1.bf16.msra.mxu0 0
        %442 = vmatprep.subr.bf16.mxu0 0
        %443 = vmatpush1.bf16.msra.mxu0 0
        %444 = vmatprep.subr.bf16.mxu0 0
        %445 = vmatpush1.bf16.msra.mxu0 0
        %446 = vmatprep.mubr.bf16.mxu0 0
        %447 = vmatmul.mubr.bf16.gmra.mrb[0].mxu0 %v408
        %v448 = vpop.f32.mrb[0].mxu0
        %v449 = vadd.f32 0.0, %v448
        %v450 = vpop.f32.mrb[0].mxu0
        %v451 = vpop.f32.mrb[0].mxu0
        %v452 = vadd.f32 0.0, %v451
        %v453 = vpop.f32.mrb[0].mxu0
        %454 = vdwg.mxu0
        %v456 = vsel %vm406, %v402, 0
        %v459 = vsel %vm410, %v403, 0
        %461 = vmatprep.subr.bf16.mxu0 0
        %462 = vmatpush1.bf16.msra.mxu0 %v459
        %463 = vmatprep.subr.bf16.mxu0 0
        %464 = vmatpush1.bf16.msra.mxu0 0
        %465 = vmatprep.subr.bf16.mxu0 0
        %466 = vmatpush1.bf16.msra.mxu0 0
        %467 = vmatprep.subr.bf16.mxu0 0
        %468 = vmatpush1.bf16.msra.mxu0 0
        %469 = vmatprep.subr.bf16.mxu0 0
        %470 = vmatpush1.bf16.msra.mxu0 0
        %471 = vmatprep.subr.bf16.mxu0 0
        %472 = vmatpush1.bf16.msra.mxu0 0
        %473 = vmatprep.subr.bf16.mxu0 0
        %474 = vmatpush1.bf16.msra.mxu0 0
        %475 = vmatprep.subr.bf16.mxu0 0
        %476 = vmatpush1.bf16.msra.mxu0 0
        %477 = vmatprep.subr.bf16.mxu0 0
        %478 = vmatpush1.bf16.msra.mxu0 0
        %479 = vmatprep.subr.bf16.mxu0 0
        %480 = vmatpush1.bf16.msra.mxu0 0
        %481 = vmatprep.subr.bf16.mxu0 0
        %482 = vmatpush1.bf16.msra.mxu0 0
        %483 = vmatprep.subr.bf16.mxu0 0
        %484 = vmatpush1.bf16.msra.mxu0 0
        %485 = vmatprep.subr.bf16.mxu0 0
        %486 = vmatpush1.bf16.msra.mxu0 0
        %487 = vmatprep.subr.bf16.mxu0 0
        %488 = vmatpush1.bf16.msra.mxu0 0
        %489 = vmatprep.subr.bf16.mxu0 0
        %490 = vmatpush1.bf16.msra.mxu0 0
        %491 = vmatprep.subr.bf16.mxu0 0
        %492 = vmatpush1.bf16.msra.mxu0 0
        %493 = vmatprep.mubr.bf16.mxu0 0
        %494 = vmatmul.mubr.bf16.gmra.mrb[0].mxu0 %v456
        %v495 = vpop.f32.mrb[0].mxu0
        %v496 = vadd.f32 %v449, %v495
        %v497 = vpop.f32.mrb[0].mxu0
        %v498 = vpop.f32.mrb[0].mxu0
        %v499 = vadd.f32 %v452, %v498
        %v500 = vpop.f32.mrb[0].mxu0
        %501 = vdwg.mxu0
        %v502 = vld [vmem:[%s3] sm:$0x1]
        %v504 = vlaneseq
        %v505 = vshrl.u32 %v504, 7
        %v506 = vsub.s32 0, %v505
        %v507 = vrot.slane %v502, %v506
        %v509 = vadd.f32 %v496, %v507
        %v510 = vadd.f32 %v499, %v507
        %v511 = vmax.f32 %v509, 0.0
        %v512 = vmax.f32 %v510, 0.0
        %v513 = vpack.c.bf16 %v512, %v511
        %514 = vmatprep.subr.bf16.mxu0 0
        %515 = vmatpush1.bf16.msra.mxu0 %v513
        %516 = vmatprep.subr.bf16.mxu0 0
        %517 = vmatpush1.bf16.msra.mxu0 0
        %518 = vmatprep.subr.bf16.mxu0 0
        %519 = vmatpush1.bf16.msra.mxu0 0
        %520 = vmatprep.subr.bf16.mxu0 0
        %521 = vmatpush1.bf16.msra.mxu0 0
        %522 = vmatprep.subr.bf16.mxu0 0
        %523 = vmatpush1.bf16.msra.mxu0 0
        %524 = vmatprep.subr.bf16.mxu0 0
        %525 = vmatpush1.bf16.msra.mxu0 0
        %526 = vmatprep.subr.bf16.mxu0 0
        %527 = vmatpush1.bf16.msra.mxu0 0
        %528 = vmatprep.subr.bf16.mxu0 0
        %529 = vmatpush1.bf16.msra.mxu0 0
        %530 = vmatprep.subr.bf16.mxu0 0
        %531 = vmatpush1.bf16.msra.mxu0 0
        %532 = vmatprep.subr.bf16.mxu0 0
        %533 = vmatpush1.bf16.msra.mxu0 0
        %534 = vmatprep.subr.bf16.mxu0 0
        %535 = vmatpush1.bf16.msra.mxu0 0
        %536 = vmatprep.subr.bf16.mxu0 0
        %537 = vmatpush1.bf16.msra.mxu0 0
        %538 = vmatprep.subr.bf16.mxu0 0
        %539 = vmatpush1.bf16.msra.mxu0 0
        %540 = vmatprep.subr.bf16.mxu0 0
        %541 = vmatpush1.bf16.msra.mxu0 0
        %542 = vmatprep.subr.bf16.mxu0 0
        %543 = vmatpush1.bf16.msra.mxu0 0
        %544 = vmatprep.subr.bf16.mxu0 0
        %545 = vmatpush1.bf16.msra.mxu0 0
        %546 = vmatprep.mubr.bf16.mxu0 0
        %547 = vmatmul.mubr.bf16.gmra.mrb[0].mxu0 %v359
        %v548 = vpop.f32.mrb[0].mxu0
        %v549 = vadd.f32 0.0, %v548
        %v550 = vpop.f32.mrb[0].mxu0
        %v551 = vpop.f32.mrb[0].mxu0
        %v552 = vadd.f32 0.0, %v551
        %v553 = vpop.f32.mrb[0].mxu0
        %554 = vdwg.mxu0
        %v555 = vpack.c.bf16 %v552, %v549
        %v556 = vld [vmem:[%s4] sm:$0xf]
        %v557 = vld [vmem:[%s4 + $0x4] sm:$0xf]
        %v558 = vld [vmem:[%s4 + $0x8] sm:$0xf]
        %v559 = vld [vmem:[%s4 + $0xc] sm:$0xf]
        %s560 = scalar_lea.vmem %s4, 16
        %v561 = vld [vmem:[%s560] sm:$0xf]
        %v562 = vld [vmem:[%s560 + $0x4] sm:$0xf]
        %v563 = vld [vmem:[%s560 + $0x8] sm:$0xf]
        %v564 = vld [vmem:[%s560 + $0xc] sm:$0xf]
        %v569 = vunpack.c.l.b16 %v561
        %v570 = vunpack.c.l.b16 %v562
        %v571 = vunpack.c.l.b16 %v563
        %v572 = vunpack.c.l.b16 %v564
        %v573 = vpack.c.b16 %v570, %v569
        %v574 = vpack.c.b16 %v572, %v571
        %vm577 = vcmask 261120
        %v579 = vsel %vm577, %v513, 0
        %581 = vmatprep.subr.bf16.mxu0 0
        %582 = vmatpush1.bf16.msra.mxu0 %v573
        %583 = vmatprep.subr.bf16.mxu0 0
        %584 = vmatpush1.bf16.msra.mxu0 %v574
        %585 = vmatprep.subr.bf16.mxu0 0
        %586 = vmatpush1.bf16.msra.mxu0 0
        %587 = vmatprep.subr.bf16.mxu0 0
        %588 = vmatpush1.bf16.msra.mxu0 0
        %589 = vmatprep.subr.bf16.mxu0 0
        %590 = vmatpush1.bf16.msra.mxu0 0
        %591 = vmatprep.subr.bf16.mxu0 0
        %592 = vmatpush1.bf16.msra.mxu0 0
        %593 = vmatprep.subr.bf16.mxu0 0
        %594 = vmatpush1.bf16.msra.mxu0 0
        %595 = vmatprep.subr.bf16.mxu0 0
        %596 = vmatpush1.bf16.msra.mxu0 0
        %597 = vmatprep.subr.bf16.mxu0 0
        %598 = vmatpush1.bf16.msra.mxu0 0
        %599 = vmatprep.subr.bf16.mxu0 0
        %600 = vmatpush1.bf16.msra.mxu0 0
        %601 = vmatprep.subr.bf16.mxu0 0
        %602 = vmatpush1.bf16.msra.mxu0 0
        %603 = vmatprep.subr.bf16.mxu0 0
        %604 = vmatpush1.bf16.msra.mxu0 0
        %605 = vmatprep.subr.bf16.mxu0 0
        %606 = vmatpush1.bf16.msra.mxu0 0
        %607 = vmatprep.subr.bf16.mxu0 0
        %608 = vmatpush1.bf16.msra.mxu0 0
        %609 = vmatprep.subr.bf16.mxu0 0
        %610 = vmatpush1.bf16.msra.mxu0 0
        %611 = vmatprep.subr.bf16.mxu0 0
        %612 = vmatpush1.bf16.msra.mxu0 0
        %613 = vmatprep.mubr.bf16.mxu0 0
        %614 = vmatmul.mubr.bf16.gmra.mrb[0].mxu0 %v579
        %v615 = vpop.f32.mrb[0].mxu0
        %v616 = vadd.f32 0.0, %v615
        %v617 = vpop.f32.mrb[0].mxu0
        %v618 = vpop.f32.mrb[0].mxu0
        %v619 = vadd.f32 0.0, %v618
        %v620 = vpop.f32.mrb[0].mxu0
        %621 = vdwg.mxu0
        %v626 = vunpack.c.l.b16 %v556
        %v627 = vunpack.c.l.b16 %v557
        %v628 = vunpack.c.l.b16 %v558
        %v629 = vunpack.c.l.b16 %v559
        %v630 = vpack.c.b16 %v627, %v626
        %v631 = vpack.c.b16 %v629, %v628
        %v635 = vsel %vm577, %v555, 0
        %637 = vmatprep.subr.bf16.mxu0 0
        %638 = vmatpush1.bf16.msra.mxu0 %v630
        %639 = vmatprep.subr.bf16.mxu0 0
        %640 = vmatpush1.bf16.msra.mxu0 %v631
        %641 = vmatprep.subr.bf16.mxu0 0
        %642 = vmatpush1.bf16.msra.mxu0 0
        %643 = vmatprep.subr.bf16.mxu0 0
        %644 = vmatpush1.bf16.msra.mxu0 0
        %645 = vmatprep.subr.bf16.mxu0 0
        %646 = vmatpush1.bf16.msra.mxu0 0
        %647 = vmatprep.subr.bf16.mxu0 0
        %648 = vmatpush1.bf16.msra.mxu0 0
        %649 = vmatprep.subr.bf16.mxu0 0
        %650 = vmatpush1.bf16.msra.mxu0 0
        %651 = vmatprep.subr.bf16.mxu0 0
        %652 = vmatpush1.bf16.msra.mxu0 0
        %653 = vmatprep.subr.bf16.mxu0 0
        %654 = vmatpush1.bf16.msra.mxu0 0
        %655 = vmatprep.subr.bf16.mxu0 0
        %656 = vmatpush1.bf16.msra.mxu0 0
        %657 = vmatprep.subr.bf16.mxu0 0
        %658 = vmatpush1.bf16.msra.mxu0 0
        %659 = vmatprep.subr.bf16.mxu0 0
        %660 = vmatpush1.bf16.msra.mxu0 0
        %661 = vmatprep.subr.bf16.mxu0 0
        %662 = vmatpush1.bf16.msra.mxu0 0
        %663 = vmatprep.subr.bf16.mxu0 0
        %664 = vmatpush1.bf16.msra.mxu0 0
        %665 = vmatprep.subr.bf16.mxu0 0
        %666 = vmatpush1.bf16.msra.mxu0 0
        %667 = vmatprep.subr.bf16.mxu0 0
        %668 = vmatpush1.bf16.msra.mxu0 0
        %669 = vmatprep.mubr.bf16.mxu0 0
        %670 = vmatmul.mubr.bf16.gmra.mrb[0].mxu0 %v635
        %v671 = vpop.f32.mrb[0].mxu0
        %v672 = vadd.f32 %v616, %v671
        %v673 = vpop.f32.mrb[0].mxu0
        %v674 = vpop.f32.mrb[0].mxu0
        %v675 = vadd.f32 %v619, %v674
        %v676 = vpop.f32.mrb[0].mxu0
        %677 = vdwg.mxu0
        %v678 = vld [vmem:[%s5] sm:$0x1]
        %v680 = vlaneseq
        %v681 = vshrl.u32 %v680, 7
        %v682 = vsub.s32 0, %v681
        %v683 = vrot.slane %v678, %v682
        %v685 = vadd.f32 %v672, %v683
        %v686 = vadd.f32 %v675, %v683
        %v687 = vmax.f32 %v685, 0.0
        %v688 = vmax.f32 %v686, 0.0
        %v689 = vpack.c.bf16 %v688, %v687
        %v690 = vld [vmem:[%s6] sm:$0xf]
        %v691 = vld [vmem:[%s6 + $0x4] sm:$0xf]
        %v692 = vld [vmem:[%s6 + $0x8] sm:$0xf]
        %v693 = vld [vmem:[%s6 + $0xc] sm:$0xf]
        %v694 = vld [vmem:[%s7] sm:$0x1]
        %v696 = vlaneseq
        %v697 = vshrl.u32 %v696, 7
        %v698 = vsub.s32 0, %v697
        %v699 = vrot.slane %v694, %v698
        %v705 = vunpack.c.l.b16 %v690
        %v706 = vunpack.c.l.b16 %v691
        %v707 = vunpack.c.l.b16 %v692
        %v708 = vunpack.c.l.b16 %v693
        %v709 = vpack.c.b16 %v706, %v705
        %v710 = vpack.c.b16 %v708, %v707
        %v714 = vsel %vm577, %v689, 0
        %716 = vmatprep.subr.bf16.mxu0 0
        %717 = vmatpush1.bf16.msra.mxu0 %v709
        %718 = vmatprep.subr.bf16.mxu0 0
        %719 = vmatpush1.bf16.msra.mxu0 %v710
        %720 = vmatprep.subr.bf16.mxu0 0
        %721 = vmatpush1.bf16.msra.mxu0 0
        %722 = vmatprep.subr.bf16.mxu0 0
        %723 = vmatpush1.bf16.msra.mxu0 0
        %724 = vmatprep.subr.bf16.mxu0 0
        %725 = vmatpush1.bf16.msra.mxu0 0
        %726 = vmatprep.subr.bf16.mxu0 0
        %727 = vmatpush1.bf16.msra.mxu0 0
        %728 = vmatprep.subr.bf16.mxu0 0
        %729 = vmatpush1.bf16.msra.mxu0 0
        %730 = vmatprep.subr.bf16.mxu0 0
        %731 = vmatpush1.bf16.msra.mxu0 0
        %732 = vmatprep.subr.bf16.mxu0 0
        %733 = vmatpush1.bf16.msra.mxu0 0
        %734 = vmatprep.subr.bf16.mxu0 0
        %735 = vmatpush1.bf16.msra.mxu0 0
        %736 = vmatprep.subr.bf16.mxu0 0
        %737 = vmatpush1.bf16.msra.mxu0 0
        %738 = vmatprep.subr.bf16.mxu0 0
        %739 = vmatpush1.bf16.msra.mxu0 0
        %740 = vmatprep.subr.bf16.mxu0 0
        %741 = vmatpush1.bf16.msra.mxu0 0
        %742 = vmatprep.subr.bf16.mxu0 0
        %743 = vmatpush1.bf16.msra.mxu0 0
        %744 = vmatprep.subr.bf16.mxu0 0
        %745 = vmatpush1.bf16.msra.mxu0 0
        %746 = vmatprep.subr.bf16.mxu0 0
        %747 = vmatpush1.bf16.msra.mxu0 0
        %748 = vmatprep.mubr.bf16.mxu0 0
        %749 = vmatmul.mubr.bf16.gmra.mrb[0].mxu0 %v714
        %v750 = vpop.f32.mrb[0].mxu0
        %v751 = vadd.f32 %v699, %v750
        %v752 = vpop.f32.mrb[0].mxu0
        %v753 = vpop.f32.mrb[0].mxu0
        %v754 = vadd.f32 %v699, %v753
        %v755 = vpop.f32.mrb[0].mxu0
        %756 = vdwg.mxu0
        %757 = vmax.xlane.f32.xlu0 %v751
        %v758 = vpop.xlane.xlu0 %757
        %759 = vmax.xlane.f32.xlu0 %v754
        %v760 = vpop.xlane.xlu0 %759
        %v761 = vsub.f32 %v751, %v758
        %v762 = vsub.f32 %v754, %v760
        %v763 = vmul.f32 %v761, 1.442695
        %v764 = vpow.pop %v763
        %v765 = vmul.f32 %v762, 1.442695
        %v766 = vpow.pop %v765
        %767 = vadd.xlane.f32.xlu0 %v764
        %v768 = vpop.xlane.xlu0 %767
        %769 = vadd.xlane.f32.xlu0 %v766
        %v770 = vpop.xlane.xlu0 %769
        %v771 = vlog2.pop %v768
        %v772 = vmul.f32 %v771, 0.6931472
        %v773 = vlog2.pop %v770
        %v774 = vmul.f32 %v773, 0.6931472
        %v775 = vsub.f32 %v761, %v772
        %v776 = vsub.f32 %v762, %v774
        %777 = vst [vmem:[%s340] sm:$0xff] %v775
        %778 = vst [vmem:[%s340 + $0x8] sm:$0xff] %v776
        %p779 = scmp.lt.s32.totalorder %s20, 7
        %s780 = scalar_select %p779, %s20, 7
        %s781 = smul.addr %s780, 2
        %s782 = smul.addr %s781, 8
        %s783 = scalar_lea.vmem %s8, %s782
        // Predicated region
        $region57: #{gcn_forward.1} parent=51 // pred_check
          %p784 = pneg %p216
        $region58: #{gcn_forward.1} parent=51 // pred_check_branch
          %786 = sbr.rel (%p784) target = $region60
        $region59: #{gcn_forward.1} parent=51 // pred_region
          _
        $region60: #{gcn_forward.1} parent=51 // pred_fallthru
          _
      $region52: #{gcn_forward.1} parent=5 // pred_fallthru
        _
      %p787 = scmp.le.s32.totalorder 2, %s15
      // Predicated region
      $region61: #{gcn_forward.1} parent=5 // pred_check
        %p788 = pneg %p787
      $region62: #{gcn_forward.1} parent=5 // pred_check_branch
        %790 = sbr.rel (%p788) target = $region64
      $region63: #{gcn_forward.1} parent=5 // pred_region
        %s791 = ssub.s32 %s15, 2
        // Predicated region
        $region65: #{gcn_forward.1} parent=63 // pred_check
          %p792 = pneg %p222
        $region66: #{gcn_forward.1} parent=63 // pred_check_branch
          %794 = sbr.rel (%p792) target = $region68
        $region67: #{gcn_forward.1} parent=63 // pred_region
          %p795 = scmp.lt.s32.totalorder %s21, 7
          %s796 = scalar_select %p795, %s21, 7
          %s797 = smul.addr %s796, 2
          %s798 = smul.addr %s797, 8
          %s799 = scalar_lea.vmem %s8, %s798
        $region68: #{gcn_forward.1} parent=63 // pred_fallthru
          _
      $region64: #{gcn_forward.1} parent=5 // pred_fallthru
        _
    $region6: #{gcn_forward.1} parent=1 // loop_footer
      %s19 = sadd.s32 1, %s15
    $region7: #{gcn_forward.1} parent=1 // loop_footer_branch
      %14 = sbr.rel target = $region3
    $region8: #{gcn_forward.1} parent=1 // loop_exit
      _
    %800 = vsyncpa [#allocation3], 1
    %s801 = scalar_lea.sflag [#allocation3], 1
    %802 = vsyncpa %s801, 1

</llo_original>
